<compile_context>
chip_gen: v7x
topology: tpu7x:2x2x1
jax: 0.10.0
libtpu: 0.0.40
codegen_flags: <defaults>
</compile_context>

<pallas_src>
import functools

import jax
import jax.numpy as jnp
from jax import lax
from jax.experimental import pallas as pl
from jax.experimental.pallas import tpu as pltpu

_BIG_NEG = -1e30  # finite "-inf" for max init / padded-column masking


def _round_up(x, m):
    return ((x + m - 1) // m) * m


def _choose_tile(n):
    # Tile for both the anchor and contrast axes. 256 matches the v6e/v7x MXU
    # and stays well inside v7x's 64 MiB VMEM even with double buffering.
    if n >= 256:
        return 256
    if n >= 128:
        return 128
    return _round_up(max(n, 8), 8)  # tiny problems: one (padded) tile


def _supcon_kernel(rowlab_ref, collab_ref, featr_ref, featc_ref, out_ref,
                   m_sc, l_sc, sadc_sc, smask_sc,
                   *, inv_temp, loss_scale, n_valid, tm, tn):
    """One (row-tile i, col-tile k) step of the online SupCon reduction.

    rowlab_ref: (tm, 1)  int32 labels of the anchor rows in this tile
    collab_ref: (1, tn)  int32 labels of the contrast columns in this tile
    featr_ref : (tm, D)  anchor features
    featc_ref : (tn, D)  contrast features
    out_ref   : (tm, 1)  per-anchor loss (written at the last k)
    scratch   : running max / denom / sum(mask*logits) / sum(mask), (tm, 1) f32
    """
    i = pl.program_id(0)
    k = pl.program_id(1)

    @pl.when(k == 0)
    def _init():
        m_sc[...] = jnp.full_like(m_sc, _BIG_NEG)
        l_sc[...] = jnp.zeros_like(l_sc)
        sadc_sc[...] = jnp.zeros_like(sadc_sc)
        smask_sc[...] = jnp.zeros_like(smask_sc)

    # Fold 1/temperature into the (tm, D) anchor tile (much cheaper than a VPU
    # pass over the (tm, tn) logits tile).
    a = featr_ref[...]
    a = (a.astype(jnp.float32) * inv_temp).astype(a.dtype)
    c = featc_ref[...]

    # anchor_dot_contrast tile: contract D of both operands (no transpose),
    # f32 accumulation on the MXU.
    adc = lax.dot_general(a, c, dimension_numbers=(((1,), (1,)), ((), ())),
                          preferred_element_type=jnp.float32)  # (tm, tn)

    # Rebuild the masks in-kernel from labels + global row/col indices.
    grow = i * tm + lax.broadcasted_iota(jnp.int32, (tm, tn), 0)
    gcol = k * tn + lax.broadcasted_iota(jnp.int32, (tm, tn), 1)
    valid = gcol < n_valid                               # drop padded columns
    lmask = jnp.logical_and(valid, grow != gcol)         # drop self-contrast
    pos = jnp.logical_and(rowlab_ref[...] == collab_ref[...], lmask)

    # Online log-sum-exp over the contrast axis (denominator of log-softmax).
    tile_max = jnp.max(jnp.where(valid, adc, _BIG_NEG), axis=1, keepdims=True)
    m_new = jnp.maximum(m_sc[...], tile_max)
    alpha = jnp.exp(m_sc[...] - m_new)
    p = jnp.where(lmask, jnp.exp(adc - m_new), 0.0)
    l_sc[...] = alpha * l_sc[...] + jnp.sum(p, axis=1, keepdims=True)
    m_sc[...] = m_new

    # Running positive-pair statistics; together with the LSE these are enough
    # to reconstruct sum(mask * log_prob) without any (tm, tn) log_prob tensor.
    sadc_sc[...] += jnp.sum(jnp.where(pos, adc, 0.0), axis=1, keepdims=True)
    smask_sc[...] += jnp.sum(pos.astype(jnp.float32), axis=1, keepdims=True)

    @pl.when(k == pl.num_programs(1) - 1)
    def _finalize():
        lse = m_sc[...] + jnp.log(l_sc[...])
        s_mask = smask_sc[...]
        # mean_log_prob_pos = sum(mask*logits)/sum(mask) - lse
        # (exact divide: it is a single (tm,1) op once per row tile; matches
        #  the reference's NaN behaviour for anchors with zero positives.)
        mean_lpp = sadc_sc[...] / s_mask - lse
        out_ref[...] = (-loss_scale) * mean_lpp


def supcon_loss(features, labels=None, mask=None, *, temperature=0.07,
                contrast_mode='all', base_temperature=0.07,
                mxu_dtype=None, tile=None):
    """JAX/Pallas SupConLoss.forward (contrast_mode='all').

    mxu_dtype: optional dtype for the MXU inputs (e.g. jnp.bfloat16 on
    v6e/v7x); accumulation is always f32.
    """
    if features.ndim < 3:
        raise ValueError('`features` needs to be [bsz, n_views, ...]')
    if features.ndim > 3:
        features = features.reshape(features.shape[0], features.shape[1], -1)
    if contrast_mode != 'all':
        # TODO(synk): contrast_mode='one' anchor path not implemented (module default is 'all').
        raise NotImplementedError("only contrast_mode='all' is implemented")

    bsz, n_views, dim = features.shape

    if labels is not None and mask is not None:
        raise ValueError('Cannot define both `labels` and `mask`')
    if mask is not None:
        # TODO(synk): arbitrary user-provided (possibly asymmetric) mask path
        # not implemented; labels / SimCLR paths build the mask in-kernel.
        raise NotImplementedError('explicit `mask` argument is not supported')
    if labels is None:
        # labels=None & mask=None  ==  mask = eye(bsz)  ==  unique labels.
        labels = jnp.arange(bsz, dtype=jnp.int32)
    labels = jnp.asarray(labels).reshape(-1).astype(jnp.int32)
    if labels.shape[0] != bsz:
        raise ValueError('Num of labels does not match num of features')

    # contrast_feature = torch.cat(torch.unbind(features, dim=1), dim=0)  -> [N, D]
    contrast_feature = jnp.concatenate(
        [features[:, v, :] for v in range(n_views)], axis=0)
    if mxu_dtype is not None:
        contrast_feature = contrast_feature.astype(mxu_dtype)
    labels_full = jnp.tile(labels, n_views)  # matches mask.repeat(anchor, contrast)

    n = bsz * n_views
    t = int(tile) if tile is not None else _choose_tile(n)
    n_pad = _round_up(n, t)
    g = n_pad // t

    feat = jnp.pad(contrast_feature, ((0, n_pad - n), (0, 0)))
    lab = jnp.pad(labels_full, (0, n_pad - n))
    row_lab = lab.reshape(n_pad, 1)
    col_lab = lab.reshape(1, n_pad)

    kernel = functools.partial(
        _supcon_kernel,
        inv_temp=float(1.0 / temperature),
        loss_scale=float(temperature / base_temperature),
        n_valid=n, tm=t, tn=t)

    # Conservative scoped-VMEM budget from the tile arithmetic (double-buffered
    # feature/label/out blocks + scratch + in-kernel (t,t) intermediates).
    itemsize = jnp.dtype(feat.dtype).itemsize
    est = (2 * (2 * t * dim * itemsize + 2 * t * 4)   # double-buffered inputs
           + 2 * t * 4 + 4 * t * 4                    # output + scratch
           + 8 * t * t * 4)                           # tile intermediates
    vmem_limit = int(min(max(est + (8 << 20), 32 << 20), 48 << 20))

    per_row = pl.pallas_call(
        kernel,
        out_shape=jax.ShapeDtypeStruct((n_pad, 1), jnp.float32),
        grid_spec=pltpu.PrefetchScalarGridSpec(
            num_scalar_prefetch=0,
            grid=(g, g),  # (anchor-row tiles, contrast-col tiles); reduction last
            in_specs=[
                pl.BlockSpec((t, 1), lambda i, k: (i, 0)),    # row labels
                pl.BlockSpec((1, t), lambda i, k: (0, k)),    # col labels
                pl.BlockSpec((t, dim), lambda i, k: (i, 0)),  # anchor tile
                pl.BlockSpec((t, dim), lambda i, k: (k, 0)),  # contrast tile
            ],
            out_specs=pl.BlockSpec((t, 1), lambda i, k: (i, 0)),
            scratch_shapes=[pltpu.VMEM((t, 1), jnp.float32)] * 4),
        compiler_params=pltpu.CompilerParams(
            dimension_semantics=("parallel", "arbitrary"),
            vmem_limit_bytes=vmem_limit),
    )(row_lab, col_lab, feat, feat)

    # loss.view(anchor_count, batch_size).mean() == mean over all N real anchors.
    return jnp.mean(per_row[:n, 0])


def _supcon_loss_ref(features, labels, temperature=0.07, base_temperature=0.07):
    """Pure-JAX reference (direct transcription of the PyTorch forward)."""
    bsz, n_views, dim = features.shape
    labels = labels.reshape(-1, 1)
    mask = (labels == labels.T).astype(jnp.float32)
    contrast_feature = jnp.concatenate(
        [features[:, v, :] for v in range(n_views)], axis=0)
    anchor_feature = contrast_feature
    adc = jnp.matmul(anchor_feature, contrast_feature.T) / temperature
    logits = adc - jnp.max(adc, axis=1, keepdims=True)
    mask = jnp.tile(mask, (n_views, n_views))
    n_total = bsz * n_views
    logits_mask = 1.0 - jnp.eye(n_total, dtype=jnp.float32)
    mask = mask * logits_mask
    exp_logits = jnp.exp(logits) * logits_mask
    log_prob = logits - jnp.log(jnp.sum(exp_logits, axis=1, keepdims=True))
    mean_log_prob_pos = jnp.sum(mask * log_prob, axis=1) / jnp.sum(mask, axis=1)
    loss = -(temperature / base_temperature) * mean_log_prob_pos
    return jnp.mean(loss.reshape(n_views, bsz))


if __name__ == "__main__":
    key = jax.random.PRNGKey(0)
    k1, k2, k3, k4 = jax.random.split(key, 4)

    # --- small, single-tile problem (N = 16) ---
    bsz, n_views, dim = 8, 2, 32
    feats = jax.random.normal(k1, (bsz, n_views, dim), dtype=jnp.float32)
    feats = feats / jnp.linalg.norm(feats, axis=-1, keepdims=True)
    labels = jax.random.randint(k2, (bsz,), 0, 3)

    loss = jax.block_until_ready(supcon_loss(feats, labels=labels))
    loss_ref = jax.block_until_ready(_supcon_loss_ref(feats, labels))
    assert jnp.allclose(loss, loss_ref, rtol=1e-4, atol=1e-4), (loss, loss_ref)

    # SimCLR degenerate path (labels=None, mask=None -> eye(bsz))
    loss_simclr = jax.block_until_ready(supcon_loss(feats))
    ref_simclr = jax.block_until_ready(
        _supcon_loss_ref(feats, jnp.arange(bsz, dtype=jnp.int32)))
    assert jnp.allclose(loss_simclr, ref_simclr, rtol=1e-4, atol=1e-4), \
        (loss_simclr, ref_simclr)

    # --- multi-tile problem (N = 192, tile = 128, padded to 256, grid 2x2) ---
    bsz2, n_views2, dim2 = 96, 2, 64
    feats2 = jax.random.normal(k3, (bsz2, n_views2, dim2), dtype=jnp.float32)
    feats2 = feats2 / jnp.linalg.norm(feats2, axis=-1, keepdims=True)
    labels2 = jax.random.randint(k4, (bsz2,), 0, 5)

    loss2 = jax.block_until_ready(supcon_loss(feats2, labels=labels2))
    loss2_ref = jax.block_until_ready(_supcon_loss_ref(feats2, labels2))
    assert jnp.allclose(loss2, loss2_ref, rtol=1e-4, atol=1e-4), (loss2, loss2_ref)

    # bf16 MXU inputs (v6e/v7x fast path) with f32 accumulation: looser tolerance.
    loss2_bf16 = jax.block_until_ready(
        supcon_loss(feats2, labels=labels2, mxu_dtype=jnp.bfloat16))
    assert jnp.allclose(loss2_bf16, loss2_ref, rtol=5e-2, atol=1e-1), \
        (loss2_bf16, loss2_ref)

    print("KERNEL_OK")
</pallas_src>

<mosaic_0001>
module attributes {stable_mosaic.version = 11 : i64} {
  func.func @_supcon_kernel(%arg0: i32, %arg1: i32, %arg2: memref<16x1xi32, #tpu.memory_space<vmem>>, %arg3: memref<1x16xi32, #tpu.memory_space<vmem>>, %arg4: memref<16x32xf32, #tpu.memory_space<vmem>>, %arg5: memref<16x32xf32, #tpu.memory_space<vmem>>, %arg6: memref<16x1xf32, #tpu.memory_space<vmem>>, %arg7: memref<16x1xf32, #tpu.memory_space<vmem>>, %arg8: memref<16x1xf32, #tpu.memory_space<vmem>>, %arg9: memref<16x1xf32, #tpu.memory_space<vmem>>, %arg10: memref<16x1xf32, #tpu.memory_space<vmem>>) attributes {dimension_semantics = [#tpu.dimension_semantics<parallel>, #tpu.dimension_semantics<arbitrary>], iteration_bounds = array<i64: 1, 1>, scalar_prefetch = 0 : i64, scratch_operands = 4 : i64, tpu.core_type = #tpu.core_type<tc>, window_params = [{transform_indices = @transform_0, window_bounds = array<i64: 16, 1>}, {transform_indices = @transform_1, window_bounds = array<i64: 1, 16>}, {transform_indices = @transform_2, window_bounds = array<i64: 16, 32>}, {transform_indices = @transform_3, window_bounds = array<i64: 16, 32>}, {transform_indices = @transform_4, window_bounds = array<i64: 16, 1>}]} {
    %c0_i32 = arith.constant 0 : i32
    %0 = arith.cmpi eq, %arg1, %c0_i32 : i32
    %1 = arith.extui %0 : i1 to i32
    %c0_i32_0 = arith.constant 0 : i32
    %2 = arith.cmpi ne, %1, %c0_i32_0 : i32
    scf.if %2 {
      %cst_38 = arith.constant -1.000000e+30 : f32
      %64 = vector.broadcast %cst_38 : f32 to vector<16x1xf32>
      %c0_39 = arith.constant 0 : index
      %c0_40 = arith.constant 0 : index
      %65 = vector.load %arg7[%c0_39, %c0_40] : memref<16x1xf32, #tpu.memory_space<vmem>>, vector<16x1xf32>
      tpu.vector_store %arg7[%c0_39, %c0_40], %64 {strides = array<i32>} : memref<16x1xf32, #tpu.memory_space<vmem>>, vector<16x1xf32>,
      %cst_41 = arith.constant 0.000000e+00 : f32
      %66 = vector.broadcast %cst_41 : f32 to vector<16x1xf32>
      %c0_42 = arith.constant 0 : index
      %c0_43 = arith.constant 0 : index
      %67 = vector.load %arg8[%c0_42, %c0_43] : memref<16x1xf32, #tpu.memory_space<vmem>>, vector<16x1xf32>
      tpu.vector_store %arg8[%c0_42, %c0_43], %66 {strides = array<i32>} : memref<16x1xf32, #tpu.memory_space<vmem>>, vector<16x1xf32>,
      %cst_44 = arith.constant 0.000000e+00 : f32
      %68 = vector.broadcast %cst_44 : f32 to vector<16x1xf32>
      %c0_45 = arith.constant 0 : index
      %c0_46 = arith.constant 0 : index
      %69 = vector.load %arg9[%c0_45, %c0_46] : memref<16x1xf32, #tpu.memory_space<vmem>>, vector<16x1xf32>
      tpu.vector_store %arg9[%c0_45, %c0_46], %68 {strides = array<i32>} : memref<16x1xf32, #tpu.memory_space<vmem>>, vector<16x1xf32>,
      %cst_47 = arith.constant 0.000000e+00 : f32
      %70 = vector.broadcast %cst_47 : f32 to vector<16x1xf32>
      %c0_48 = arith.constant 0 : index
      %c0_49 = arith.constant 0 : index
      %71 = vector.load %arg10[%c0_48, %c0_49] : memref<16x1xf32, #tpu.memory_space<vmem>>, vector<16x1xf32>
      tpu.vector_store %arg10[%c0_48, %c0_49], %70 {strides = array<i32>} : memref<16x1xf32, #tpu.memory_space<vmem>>, vector<16x1xf32>,
    } else {
    }
    %c0 = arith.constant 0 : index
    %c0_1 = arith.constant 0 : index
    %3 = vector.load %arg4[%c0, %c0_1] : memref<16x32xf32, #tpu.memory_space<vmem>>, vector<16x32xf32>
    %cst = arith.constant 14.2857141 : f32
    %4 = vector.broadcast %cst : f32 to vector<16x32xf32>
    %5 = arith.mulf %3, %4 : vector<16x32xf32>
    %c0_2 = arith.constant 0 : index
    %c0_3 = arith.constant 0 : index
    %6 = vector.load %arg5[%c0_2, %c0_3] : memref<16x32xf32, #tpu.memory_space<vmem>>, vector<16x32xf32>
    %cst_4 = arith.constant dense<0.000000e+00> : vector<16x16xf32>
    %7 = tpu.matmul %5, %6, %cst_4 {dimension_numbers = #tpu.dot_dimension_numbers<[1], [1], [0], [0], [0, 0, 1, 0], [], []>} : vector<16x32xf32>, vector<16x32xf32>, vector<16x16xf32> -> vector<16x16xf32>
    %c16_i32 = arith.constant 16 : i32
    %8 = arith.muli %arg0, %c16_i32 : i32
    %9 = tpu.iota {dimensions = array<i32: 0>} : vector<16x16xi32>
    %10 = vector.broadcast %8 : i32 to vector<16x16xi32>
    %11 = arith.addi %10, %9 : vector<16x16xi32>
    %c16_i32_5 = arith.constant 16 : i32
    %12 = arith.muli %arg1, %c16_i32_5 : i32
    %13 = tpu.iota {dimensions = array<i32: 1>} : vector<16x16xi32>
    %14 = vector.broadcast %12 : i32 to vector<16x16xi32>
    %15 = arith.addi %14, %13 : vector<16x16xi32>
    %c16_i32_6 = arith.constant 16 : i32
    %16 = vector.broadcast %c16_i32_6 : i32 to vector<16x16xi32>
    %17 = arith.cmpi slt, %15, %16 : vector<16x16xi32>
    %18 = arith.cmpi ne, %11, %15 : vector<16x16xi32>
    %19 = arith.andi %17, %18 : vector<16x16xi1>
    %c0_7 = arith.constant 0 : index
    %c0_8 = arith.constant 0 : index
    %20 = vector.load %arg2[%c0_7, %c0_8] : memref<16x1xi32, #tpu.memory_space<vmem>>, vector<16x1xi32>
    %c0_9 = arith.constant 0 : index
    %c0_10 = arith.constant 0 : index
    %21 = vector.load %arg3[%c0_9, %c0_10] : memref<1x16xi32, #tpu.memory_space<vmem>>, vector<1x16xi32>
    %22 = vector.broadcast %20 : vector<16x1xi32> to vector<16x16xi32>
    %23 = vector.broadcast %21 : vector<1x16xi32> to vector<16x16xi32>
    %24 = arith.cmpi eq, %22, %23 : vector<16x16xi32>
    %25 = arith.andi %24, %19 : vector<16x16xi1>
    %cst_11 = arith.constant -1.000000e+30 : f32
    %26 = vector.broadcast %cst_11 : f32 to vector<16x16xf32>
    %27 = arith.select %17, %7, %26 : vector<16x16xi1>, vector<16x16xf32>
    %cst_12 = arith.constant dense<0xFF800000> : vector<16xf32>
    %28 = vector.multi_reduction <maximumf>, %27, %cst_12 [1] : vector<16x16xf32> to vector<16xf32>
    %29 = vector.shape_cast %28 : vector<16xf32> to vector<16x1xf32>
    %c0_13 = arith.constant 0 : index
    %c0_14 = arith.constant 0 : index
    %30 = vector.load %arg7[%c0_13, %c0_14] : memref<16x1xf32, #tpu.memory_space<vmem>>, vector<16x1xf32>
    %31 = arith.maximumf %30, %29 : vector<16x1xf32>
    %c0_15 = arith.constant 0 : index
    %c0_16 = arith.constant 0 : index
    %32 = vector.load %arg7[%c0_15, %c0_16] : memref<16x1xf32, #tpu.memory_space<vmem>>, vector<16x1xf32>
    %33 = arith.subf %32, %31 : vector<16x1xf32>
    %34 = math.exp %33 : vector<16x1xf32>
    %35 = vector.broadcast %31 : vector<16x1xf32> to vector<16x16xf32>
    %36 = arith.subf %7, %35 : vector<16x16xf32>
    %37 = math.exp %36 : vector<16x16xf32>
    %cst_17 = arith.constant 0.000000e+00 : f32
    %38 = vector.broadcast %cst_17 : f32 to vector<16x16xf32>
    %39 = arith.select %19, %37, %38 : vector<16x16xi1>, vector<16x16xf32>
    %c0_18 = arith.constant 0 : index
    %c0_19 = arith.constant 0 : index
    %40 = vector.load %arg8[%c0_18, %c0_19] : memref<16x1xf32, #tpu.memory_space<vmem>>, vector<16x1xf32>
    %41 = arith.mulf %34, %40 : vector<16x1xf32>
    %cst_20 = arith.constant dense<0.000000e+00> : vector<16xf32>
    %42 = vector.multi_reduction <add>, %39, %cst_20 [1] : vector<16x16xf32> to vector<16xf32>
    %43 = vector.shape_cast %42 : vector<16xf32> to vector<16x1xf32>
    %44 = arith.addf %41, %43 : vector<16x1xf32>
    %c0_21 = arith.constant 0 : index
    %c0_22 = arith.constant 0 : index
    %45 = vector.load %arg8[%c0_21, %c0_22] : memref<16x1xf32, #tpu.memory_space<vmem>>, vector<16x1xf32>
    tpu.vector_store %arg8[%c0_21, %c0_22], %44 {strides = array<i32>} : memref<16x1xf32, #tpu.memory_space<vmem>>, vector<16x1xf32>,
    %c0_23 = arith.constant 0 : index
    %c0_24 = arith.constant 0 : index
    %46 = vector.load %arg7[%c0_23, %c0_24] : memref<16x1xf32, #tpu.memory_space<vmem>>, vector<16x1xf32>
    tpu.vector_store %arg7[%c0_23, %c0_24], %31 {strides = array<i32>} : memref<16x1xf32, #tpu.memory_space<vmem>>, vector<16x1xf32>,
    %c0_25 = arith.constant 0 : index
    %c0_26 = arith.constant 0 : index
    %47 = vector.load %arg9[%c0_25, %c0_26] : memref<16x1xf32, #tpu.memory_space<vmem>>, vector<16x1xf32>
    %cst_27 = arith.constant 0.000000e+00 : f32
    %48 = vector.broadcast %cst_27 : f32 to vector<16x16xf32>
    %49 = arith.select %25, %7, %48 : vector<16x16xi1>, vector<16x16xf32>
    %cst_28 = arith.constant dense<0.000000e+00> : vector<16xf32>
    %50 = vector.multi_reduction <add>, %49, %cst_28 [1] : vector<16x16xf32> to vector<16xf32>
    %51 = vector.shape_cast %50 : vector<16xf32> to vector<16x1xf32>
    %52 = arith.addf %47, %51 : vector<16x1xf32>
    %c0_29 = arith.constant 0 : index
    %c0_30 = arith.constant 0 : index
    %53 = vector.load %arg9[%c0_29, %c0_30] : memref<16x1xf32, #tpu.memory_space<vmem>>, vector<16x1xf32>
    tpu.vector_store %arg9[%c0_29, %c0_30], %52 {strides = array<i32>} : memref<16x1xf32, #tpu.memory_space<vmem>>, vector<16x1xf32>,
    %c0_31 = arith.constant 0 : index
    %c0_32 = arith.constant 0 : index
    %54 = vector.load %arg10[%c0_31, %c0_32] : memref<16x1xf32, #tpu.memory_space<vmem>>, vector<16x1xf32>
    %55 = arith.extui %25 : vector<16x16xi1> to vector<16x16xi32>
    %56 = arith.sitofp %55 : vector<16x16xi32> to vector<16x16xf32>
    %cst_33 = arith.constant dense<0.000000e+00> : vector<16xf32>
    %57 = vector.multi_reduction <add>, %56, %cst_33 [1] : vector<16x16xf32> to vector<16xf32>
    %58 = vector.shape_cast %57 : vector<16xf32> to vector<16x1xf32>
    %59 = arith.addf %54, %58 : vector<16x1xf32>
    %c0_34 = arith.constant 0 : index
    %c0_35 = arith.constant 0 : index
    %60 = vector.load %arg10[%c0_34, %c0_35] : memref<16x1xf32, #tpu.memory_space<vmem>>, vector<16x1xf32>
    tpu.vector_store %arg10[%c0_34, %c0_35], %59 {strides = array<i32>} : memref<16x1xf32, #tpu.memory_space<vmem>>, vector<16x1xf32>,
    %c0_i32_36 = arith.constant 0 : i32
    %61 = arith.cmpi eq, %arg1, %c0_i32_36 : i32
    %62 = arith.extui %61 : i1 to i32
    %c0_i32_37 = arith.constant 0 : i32
    %63 = arith.cmpi ne, %62, %c0_i32_37 : i32
    scf.if %63 {
      %c0_38 = arith.constant 0 : index
      %c0_39 = arith.constant 0 : index
      %64 = vector.load %arg7[%c0_38, %c0_39] : memref<16x1xf32, #tpu.memory_space<vmem>>, vector<16x1xf32>
      %c0_40 = arith.constant 0 : index
      %c0_41 = arith.constant 0 : index
      %65 = vector.load %arg8[%c0_40, %c0_41] : memref<16x1xf32, #tpu.memory_space<vmem>>, vector<16x1xf32>
      %66 = math.log %65 : vector<16x1xf32>
      %67 = arith.addf %64, %66 : vector<16x1xf32>
      %c0_42 = arith.constant 0 : index
      %c0_43 = arith.constant 0 : index
      %68 = vector.load %arg10[%c0_42, %c0_43] : memref<16x1xf32, #tpu.memory_space<vmem>>, vector<16x1xf32>
      %c0_44 = arith.constant 0 : index
      %c0_45 = arith.constant 0 : index
      %69 = vector.load %arg9[%c0_44, %c0_45] : memref<16x1xf32, #tpu.memory_space<vmem>>, vector<16x1xf32>
      %70 = arith.divf %69, %68 : vector<16x1xf32>
      %71 = arith.subf %70, %67 : vector<16x1xf32>
      %cst_46 = arith.constant -1.000000e+00 : f32
      %72 = vector.broadcast %cst_46 : f32 to vector<16x1xf32>
      %73 = arith.mulf %72, %71 : vector<16x1xf32>
      %c0_47 = arith.constant 0 : index
      %c0_48 = arith.constant 0 : index
      %74 = vector.load %arg6[%c0_47, %c0_48] : memref<16x1xf32, #tpu.memory_space<vmem>>, vector<16x1xf32>
      tpu.vector_store %arg6[%c0_47, %c0_48], %73 {strides = array<i32>} : memref<16x1xf32, #tpu.memory_space<vmem>>, vector<16x1xf32>,
    } else {
    }
    return
  }
  func.func @transform_0(%arg0: i32, %arg1: i32) -> (i32, i32) {
    %c0_i32 = arith.constant 0 : i32
    %c0_i32_0 = arith.constant 0 : i32
    return %arg0, %c0_i32 : i32, i32
  }
  func.func @transform_1(%arg0: i32, %arg1: i32) -> (i32, i32) {
    %c0_i32 = arith.constant 0 : i32
    %c0_i32_0 = arith.constant 0 : i32
    return %c0_i32, %arg1 : i32, i32
  }
  func.func @transform_2(%arg0: i32, %arg1: i32) -> (i32, i32) {
    %c0_i32 = arith.constant 0 : i32
    %c0_i32_0 = arith.constant 0 : i32
    return %arg0, %c0_i32 : i32, i32
  }
  func.func @transform_3(%arg0: i32, %arg1: i32) -> (i32, i32) {
    %c0_i32 = arith.constant 0 : i32
    %c0_i32_0 = arith.constant 0 : i32
    return %arg1, %c0_i32 : i32, i32
  }
  func.func @transform_4(%arg0: i32, %arg1: i32) -> (i32, i32) {
    %c0_i32 = arith.constant 0 : i32
    %c0_i32_0 = arith.constant 0 : i32
    return %arg0, %c0_i32 : i32, i32
  }
}

</mosaic_0001>

<llo_original>
// kernel: tpu_custom_call.1
$region0: #{tpu_custom_call.1}
  #allocation0 [shape = 'u32[]', space=smem, size = 0x4, offset = 0x4, fixed_abs, tag = 'smem constant byte address 0x4 - core index']
  #allocation1 [shape = 'u32[144,128]{1,0:T(1,128)}', space=vmem, size = 0x12000, scoped, tag = 'internal scratch']
  #allocation2 [shape = 'f32[16,1]{1,0:T(8,128)}', space=vmem, size = 0x2000, scoped, tag = 'scratch operand']
  #allocation3 [shape = 'f32[16,1]{1,0:T(8,128)}', space=vmem, size = 0x2000, scoped, tag = 'scratch operand']
  #allocation4 [shape = 'f32[16,1]{1,0:T(8,128)}', space=vmem, size = 0x2000, scoped, tag = 'scratch operand']
  #allocation5 [shape = 'f32[16,1]{1,0:T(8,128)}', space=vmem, size = 0x2000, scoped, tag = 'scratch operand']
  %s0 = inlined_call_operand.vmem [shape: s32[16,1], index: 0, kind: input, shape index: {}]
  %s1 = inlined_call_operand.vmem [shape: s32[1,16], index: 1, kind: input, shape index: {}]
  %s2 = inlined_call_operand.vmem [shape: f32[16,32], index: 2, kind: input, shape index: {}]
  %s3 = inlined_call_operand.hbm [shape: f32[16,32], index: 3, kind: input, shape index: {}]
  %s4 = inlined_call_operand.vmem [shape: f32[16,1], index: 4, kind: output, shape index: {}]
  %s5 = sld [smem:[#allocation0]]
  $region38: #{tpu_custom_call.1} parent=0
    _
  %s7 = ssub.s32 1, %s5
  %s8 = scalar_select 0, %s7, %s5
  $region1: #{tpu_custom_call.1} parent=0
    #allocation6 [shape = 'u8[8192]{0}', space=vmem, size = 0x2000, scoped, tag = 'input window, operand 3, single buffered']
    #allocation7 [shape = 's32[1]{0}', space=sflag, size = 0x4, scoped, tag = 'scoped memory for tpu_custom_call.1']
    %9 = vsyncpa [#allocation7], 0
    // Predicated region
    $region2: #{tpu_custom_call.1} parent=1 // pred_check
      _
    $region3: #{tpu_custom_call.1} parent=1 // pred_check_branch
      %11 = sbr.rel (0) target = $region5
    $region4: #{tpu_custom_call.1} parent=1 // pred_region
      _
    $region5: #{tpu_custom_call.1} parent=1 // pred_fallthru
      _
    // Predicated region
    $region6: #{tpu_custom_call.1} parent=1 // pred_check
      _
    $region7: #{tpu_custom_call.1} parent=1 // pred_check_branch
      %13 = sbr.rel (0) target = $region9
    $region8: #{tpu_custom_call.1} parent=1 // pred_region
      _
    $region9: #{tpu_custom_call.1} parent=1 // pred_fallthru
      _
    // Predicated region
    $region10: #{tpu_custom_call.1} parent=1 // pred_check
      _
    $region11: #{tpu_custom_call.1} parent=1 // pred_check_branch
      %15 = sbr.rel (0) target = $region13
    $region12: #{tpu_custom_call.1} parent=1 // pred_region
      _
    $region13: #{tpu_custom_call.1} parent=1 // pred_fallthru
      _
    // Predicated region
    $region14: #{tpu_custom_call.1} parent=1 // pred_check
      _
    $region15: #{tpu_custom_call.1} parent=1 // pred_check_branch
      %17 = sbr.rel (0) target = $region17
    $region16: #{tpu_custom_call.1} parent=1 // pred_region
      %s19 = ssub.s32 256, 256
      %20 = vsyncadd [#allocation7], %s19
      %s21 = sshll.u32 [#allocation6], 4
      %s22 = int_to_ptr.vmem [resolvable:$true] %s21
      %27 = dma.hbm_to_vmem [thread:$0]  %s3, 256, %s22, [#allocation7], 128, 128, 8
    $region17: #{tpu_custom_call.1} parent=1 // pred_fallthru
      _
    // Predicated region
    $region18: #{tpu_custom_call.1} parent=1 // pred_check
      _
    $region19: #{tpu_custom_call.1} parent=1 // pred_check_branch
      %29 = sbr.rel (0) target = $region21
    $region20: #{tpu_custom_call.1} parent=1 // pred_region
      %30 = dma.done [#allocation7], 256
    $region21: #{tpu_custom_call.1} parent=1 // pred_fallthru
      _
    %p31 = scmp.eq.s32.totalorder 0, 0
    // Predicated region
    $region22: #{tpu_custom_call.1} parent=1 // pred_check
      %p32 = pneg %p31
    $region23: #{tpu_custom_call.1} parent=1 // pred_check_branch
      %34 = sbr.rel (%p32) target = $region25
    $region24: #{tpu_custom_call.1} parent=1 // pred_region
      %vm35 = vcmask 7168
      %36 = vst.msk [vmem:[#allocation2] sm:$0xff] %vm35, -1e+30
      %37 = vst.msk [vmem:[#allocation2 + $0x8] sm:$0xff] %vm35, -1e+30
      %38 = vst.msk [vmem:[#allocation3] sm:$0xff] %vm35, 0.0
      %39 = vst.msk [vmem:[#allocation3 + $0x8] sm:$0xff] %vm35, 0.0
      %40 = vst.msk [vmem:[#allocation4] sm:$0xff] %vm35, 0.0
      %41 = vst.msk [vmem:[#allocation4 + $0x8] sm:$0xff] %vm35, 0.0
      %42 = vst.msk [vmem:[#allocation5] sm:$0xff] %vm35, 0.0
      %43 = vst.msk [vmem:[#allocation5 + $0x8] sm:$0xff] %vm35, 0.0
    $region25: #{tpu_custom_call.1} parent=1 // pred_fallthru
      _
    %v44 = vld [vmem:[%s2] sm:$0xff]
    %v45 = vld [vmem:[%s2 + $0x8] sm:$0xff]
    %v46 = vmul.f32 %v44, 14.285714
    %v47 = vmul.f32 %v45, 14.285714
    %v48 = vld [vmem:[#allocation6] sm:$0xff]
    %v49 = vld [vmem:[#allocation6 + $0x8] sm:$0xff]
    %vm50 = vcmask 261120
    %v52 = vsel %vm50, %v46, 0
    %v55 = vsel %vm50, %v47, 0
    %v58 = vsel %vm50, %v48, 0
    %v61 = vsel %vm50, %v49, 0
    %63 = vmatprep.subr.mxu0 0.0
    %64 = vmatpush1.xpose.msra.mxu0 %v58
    %65 = vmatprep.subr.mxu0 0.0
    %66 = vmatpush1.xpose.msra.mxu0 %v61
    %67 = vmatprep.subr.mxu0 0.0
    %68 = vmatpush1.xpose.msra.mxu0 0.0
    %69 = vmatprep.subr.mxu0 0.0
    %70 = vmatpush1.xpose.msra.mxu0 0.0
    %71 = vmatprep.subr.mxu0 0.0
    %72 = vmatpush1.xpose.msra.mxu0 0.0
    %73 = vmatprep.subr.mxu0 0.0
    %74 = vmatpush1.xpose.msra.mxu0 0.0
    %75 = vmatprep.subr.mxu0 0.0
    %76 = vmatpush1.xpose.msra.mxu0 0.0
    %77 = vmatprep.subr.mxu0 0.0
    %78 = vmatpush1.xpose.msra.mxu0 0.0
    %79 = vmatprep.subr.mxu0 0.0
    %80 = vmatpush1.xpose.msra.mxu0 0.0
    %81 = vmatprep.subr.mxu0 0.0
    %82 = vmatpush1.xpose.msra.mxu0 0.0
    %83 = vmatprep.subr.mxu0 0.0
    %84 = vmatpush1.xpose.msra.mxu0 0.0
    %85 = vmatprep.subr.mxu0 0.0
    %86 = vmatpush1.xpose.msra.mxu0 0.0
    %87 = vmatprep.subr.mxu0 0.0
    %88 = vmatpush1.xpose.msra.mxu0 0.0
    %89 = vmatprep.subr.mxu0 0.0
    %90 = vmatpush1.xpose.msra.mxu0 0.0
    %91 = vmatprep.subr.mxu0 0.0
    %92 = vmatpush1.xpose.msra.mxu0 0.0
    %93 = vmatprep.subr.mxu0 0.0
    %94 = vmatpush1.xpose.msra.mxu0 0.0
    %95 = vmatprep.subr.mxu0 0.0
    %96 = vmatpush1.xpose.msra.mxu0 0.0
    %97 = vmatprep.subr.mxu0 0.0
    %98 = vmatpush1.xpose.msra.mxu0 0.0
    %99 = vmatprep.subr.mxu0 0.0
    %100 = vmatpush1.xpose.msra.mxu0 0.0
    %101 = vmatprep.subr.mxu0 0.0
    %102 = vmatpush1.xpose.msra.mxu0 0.0
    %103 = vmatprep.subr.mxu0 0.0
    %104 = vmatpush1.xpose.msra.mxu0 0.0
    %105 = vmatprep.subr.mxu0 0.0
    %106 = vmatpush1.xpose.msra.mxu0 0.0
    %107 = vmatprep.subr.mxu0 0.0
    %108 = vmatpush1.xpose.msra.mxu0 0.0
    %109 = vmatprep.subr.mxu0 0.0
    %110 = vmatpush1.xpose.msra.mxu0 0.0
    %111 = vmatprep.subr.mxu0 0.0
    %112 = vmatpush1.xpose.msra.mxu0 0.0
    %113 = vmatprep.subr.mxu0 0.0
    %114 = vmatpush1.xpose.msra.mxu0 0.0
    %115 = vmatprep.subr.mxu0 0.0
    %116 = vmatpush1.xpose.msra.mxu0 0.0
    %117 = vmatprep.subr.mxu0 0.0
    %118 = vmatpush1.xpose.msra.mxu0 0.0
    %119 = vmatprep.subr.mxu0 0.0
    %120 = vmatpush1.xpose.msra.mxu0 0.0
    %121 = vmatprep.subr.mxu0 0.0
    %122 = vmatpush1.xpose.msra.mxu0 0.0
    %123 = vmatprep.subr.mxu0 0.0
    %124 = vmatpush1.xpose.msra.mxu0 0.0
    %125 = vmatprep.subr.mxu0 0.0
    %126 = vmatpush1.xpose.msra.mxu0 0.0
    %127 = vmatprep.mubr.f32.mxu0 0.0
    %128 = vmatmul.mubr.f32.gmra.mrb[0].mxu0 %v52
    %v129 = vpop.f32.mrb[0].mxu0
    %v130 = vadd.f32 0.0, %v129
    %v131 = vpop.f32.mrb[0].mxu0
    %132 = vmatprep.mubr.f32.mxu0 0.0
    %133 = vmatmul.mubr.f32.gmra.mrb[0].mxu0 %v55
    %v134 = vpop.f32.mrb[0].mxu0
    %v135 = vadd.f32 0.0, %v134
    %v136 = vpop.f32.mrb[0].mxu0
    %137 = vdwg.mxu0
    %s138 = smul.u32 0, 16
    %v139 = vlaneseq
    %v140 = vshrl.u32 %v139, 7
    %v141 = vadd.s32 %v140, 8
    %v142 = vstv %s138
    %v143 = vadd.s32 %v142, %v140
    %v144 = vadd.s32 %v142, %v141
    %s145 = smul.u32 0, 16
    %v146 = vlaneseq
    %v147 = vand.u32 %v146, 127
    %v148 = vstv %s145
    %v149 = vadd.s32 %v148, %v147
    %vm150 = vcmp.lt.s32.totalorder %v149, 16
    %vm151 = vcmp.ne.s32.totalorder %v143, %v149
    %vm152 = vcmp.ne.s32.totalorder %v144, %v149
    %vm153 = vmand %vm150, %vm151
    %vm154 = vmand %vm150, %vm152
    %v155 = vld [vmem:[%s0] sm:$0xff]
    %v156 = vld [vmem:[%s0 + $0x8] sm:$0xff]
    %v157 = vld [vmem:[%s1] sm:$0x1]
    %158 = vset.pattern.permute.xlu0 0
    %159 = vperm.xlu0 %158, %v155
    %v160 = vpop.permute.xlu0 %159
    %161 = vset.pattern.permute.xlu0 0
    %162 = vperm.xlu0 %161, %v156
    %v163 = vpop.permute.xlu0 %162
    %v164 = vlaneseq
    %v165 = vshrl.u32 %v164, 7
    %v166 = vsub.s32 0, %v165
    %v167 = vrot.slane %v157, %v166
    %vm168 = vcmp.eq.s32.totalorder %v160, %v167
    %vm169 = vcmp.eq.s32.totalorder %v163, %v167
    %vm170 = vmand %vm168, %vm153
    %vm171 = vmand %vm169, %vm154
    %v172 = vsel %vm150, %v130, -1e+30
    %v173 = vsel %vm150, %v135, -1e+30
    %vm174 = vcmask 130048
    %v175 = vsel %vm174, %v172, -inf
    %176 = vmax.xlane.f32.xlu0 %v175
    %v177 = vpop.xlane.xlu0 %176
    %v178 = vsel %vm174, %v173, -inf
    %179 = vmax.xlane.f32.xlu0 %v178
    %v180 = vpop.xlane.xlu0 %179
    %v181 = vld [vmem:[#allocation2] sm:$0xff]
    %v182 = vld [vmem:[#allocation2 + $0x8] sm:$0xff]
    %v183 = vmax.f32 %v181, %v177
    %v184 = vmax.f32 %v182, %v180
    %v185 = vsub.f32 %v181, %v183
    %v186 = vsub.f32 %v182, %v184
    %v187 = vmul.f32 %v185, 1.442695
    %v188 = vpow.pop %v187
    %v189 = vmul.f32 %v186, 1.442695
    %v190 = vpow.pop %v189
    %192 = vset.pattern.permute.xlu0 0
    %193 = vperm.xlu0 %192, %v183
    %v194 = vpop.permute.xlu0 %193
    %197 = vset.pattern.permute.xlu0 0
    %198 = vperm.xlu0 %197, %v184
    %v199 = vpop.permute.xlu0 %198
    %v201 = vsub.f32 %v130, %v194
    %v202 = vsub.f32 %v135, %v199
    %v203 = vmul.f32 %v201, 1.442695
    %v204 = vpow.pop %v203
    %v205 = vmul.f32 %v202, 1.442695
    %v206 = vpow.pop %v205
    %v207 = vsel %vm153, %v204, 0.0
    %v208 = vsel %vm154, %v206, 0.0
    %v209 = vld [vmem:[#allocation3] sm:$0xff]
    %v210 = vld [vmem:[#allocation3 + $0x8] sm:$0xff]
    %v211 = vmul.f32 %v188, %v209
    %v212 = vmul.f32 %v190, %v210
    %v213 = vsel %vm174, %v207, 0.0
    %214 = vadd.xlane.f32.xlu0 %v213
    %v215 = vpop.xlane.xlu0 %214
    %v216 = vsel %vm174, %v208, 0.0
    %217 = vadd.xlane.f32.xlu0 %v216
    %v218 = vpop.xlane.xlu0 %217
    %v219 = vadd.f32 %v211, %v215
    %v220 = vadd.f32 %v212, %v218
    %vm221 = vcmask 7168
    %222 = vst.msk [vmem:[#allocation3] sm:$0xff] %vm221, %v219
    %223 = vst.msk [vmem:[#allocation3 + $0x8] sm:$0xff] %vm221, %v220
    %224 = vst.msk [vmem:[#allocation2] sm:$0xff] %vm221, %v183
    %225 = vst.msk [vmem:[#allocation2 + $0x8] sm:$0xff] %vm221, %v184
    %v226 = vld [vmem:[#allocation4] sm:$0xff]
    %v227 = vld [vmem:[#allocation4 + $0x8] sm:$0xff]
    %v228 = vsel %vm170, %v130, 0.0
    %v229 = vsel %vm171, %v135, 0.0
    %v230 = vsel %vm174, %v228, 0.0
    %231 = vadd.xlane.f32.xlu0 %v230
    %v232 = vpop.xlane.xlu0 %231
    %v233 = vsel %vm174, %v229, 0.0
    %234 = vadd.xlane.f32.xlu0 %v233
    %v235 = vpop.xlane.xlu0 %234
    %v236 = vadd.f32 %v226, %v232
    %v237 = vadd.f32 %v227, %v235
    %238 = vst.msk [vmem:[#allocation4] sm:$0xff] %vm221, %v236
    %239 = vst.msk [vmem:[#allocation4 + $0x8] sm:$0xff] %vm221, %v237
    %v240 = vld [vmem:[#allocation5] sm:$0xff]
    %v241 = vld [vmem:[#allocation5 + $0x8] sm:$0xff]
    %v242 = vsel %vm170, 1, 0
    %v243 = vsel %vm171, 1, 0
    %v244 = vcvt.s32.f32 %v242
    %v245 = vcvt.s32.f32 %v243
    %v246 = vsel %vm174, %v244, 0.0
    %247 = vadd.xlane.f32.xlu0 %v246
    %v248 = vpop.xlane.xlu0 %247
    %v249 = vsel %vm174, %v245, 0.0
    %250 = vadd.xlane.f32.xlu0 %v249
    %v251 = vpop.xlane.xlu0 %250
    %v252 = vadd.f32 %v240, %v248
    %v253 = vadd.f32 %v241, %v251
    %254 = vst.msk [vmem:[#allocation5] sm:$0xff] %vm221, %v252
    %255 = vst.msk [vmem:[#allocation5 + $0x8] sm:$0xff] %vm221, %v253
    // Predicated region
    $region26: #{tpu_custom_call.1} parent=1 // pred_check
      %p256 = pneg %p31
    $region27: #{tpu_custom_call.1} parent=1 // pred_check_branch
      %258 = sbr.rel (%p256) target = $region29
    $region28: #{tpu_custom_call.1} parent=1 // pred_region
      %v259 = vld [vmem:[#allocation2] sm:$0xff]
      %v260 = vld [vmem:[#allocation2 + $0x8] sm:$0xff]
      %v261 = vld [vmem:[#allocation3] sm:$0xff]
      %v262 = vld [vmem:[#allocation3 + $0x8] sm:$0xff]
      %v263 = vlog2.pop %v261
      %v264 = vmul.f32 %v263, 0.6931472
      %v265 = vlog2.pop %v262
      %v266 = vmul.f32 %v265, 0.6931472
      %v267 = vadd.f32 %v259, %v264
      %v268 = vadd.f32 %v260, %v266
      %v269 = vld [vmem:[#allocation5] sm:$0xff]
      %v270 = vld [vmem:[#allocation5 + $0x8] sm:$0xff]
      %v271 = vld [vmem:[#allocation4] sm:$0xff]
      %v272 = vld [vmem:[#allocation4 + $0x8] sm:$0xff]
      %v273 = vrcp.pop %v269
      %v274 = vmul.f32 %v271, %v273
      %v275 = vrcp.pop %v270
      %v276 = vmul.f32 %v272, %v275
      %v277 = vsub.f32 %v274, %v267
      %v278 = vsub.f32 %v276, %v268
      %v279 = vmul.f32 %v277, -1.0
      %v280 = vmul.f32 %v278, -1.0
      %281 = vst.msk [vmem:[%s4] sm:$0xff] %vm221, %v279
      %282 = vst.msk [vmem:[%s4 + $0x8] sm:$0xff] %vm221, %v280
    $region29: #{tpu_custom_call.1} parent=1 // pred_fallthru
      _
    // Predicated region
    $region30: #{tpu_custom_call.1} parent=1 // pred_check
      _
    $region31: #{tpu_custom_call.1} parent=1 // pred_check_branch
      %284 = sbr.rel (0) target = $region33
    $region32: #{tpu_custom_call.1} parent=1 // pred_region
      _
    $region33: #{tpu_custom_call.1} parent=1 // pred_fallthru
      _
    // Predicated region
    $region34: #{tpu_custom_call.1} parent=1 // pred_check
      _
    $region35: #{tpu_custom_call.1} parent=1 // pred_check_branch
      %286 = sbr.rel (0) target = $region37
    $region36: #{tpu_custom_call.1} parent=1 // pred_region
      _
    $region37: #{tpu_custom_call.1} parent=1 // pred_fallthru
      _
    %287 = vsyncpa [#allocation7], 1

</llo_original>
